<compile_context>
chip_gen: v7x
topology: tpu7x:2x2x1
jax: 0.10.0
libtpu: 0.0.40
codegen_flags: <defaults>
</compile_context>

<pallas_src>
import jax
import jax.numpy as jnp
from jax.experimental import pallas as pl
from jax.experimental.pallas import tpu as pltpu


def _make_cdefunc_kernel(has_hidden, use_bf16):
    cast_dtype = jnp.bfloat16 if use_bf16 else None

    def mm(x, w):
        if cast_dtype is not None and x.dtype != cast_dtype:
            x = x.astype(cast_dtype)
        return jnp.dot(x, w, preferred_element_type=jnp.float32)

    if has_hidden:
        def kernel(z_ref, w_in_ref, b_in_ref, w_hid_ref, b_hid_ref,
                   w_out_ref, b_out_ref, o_ref):
            h = jnp.maximum(mm(z_ref[...], w_in_ref[...]) + b_in_ref[...], 0.0)
            for i in range(w_hid_ref.shape[0]):   # statically unrolled (tiny)
                h = jnp.maximum(mm(h, w_hid_ref[i]) + b_hid_ref[i], 0.0)
            o_ref[...] = jnp.tanh(mm(h, w_out_ref[...]) + b_out_ref[...])
    else:
        def kernel(z_ref, w_in_ref, b_in_ref, w_out_ref, b_out_ref, o_ref):
            h = jnp.maximum(mm(z_ref[...], w_in_ref[...]) + b_in_ref[...], 0.0)
            o_ref[...] = jnp.tanh(mm(h, w_out_ref[...]) + b_out_ref[...])

    return kernel


def _pick_batch_tile(B, batch_tile):
    """Batch tile selection.

    * B > batch_tile: big tiles (default 1024) so per-tile DMA dwarfs the
      ~0.35 us per-grid-step overhead.
    * 64 <= B <= batch_tile: split into >= 2 tiles (multiple of 8 for the
      sublane constraint) so both v7x TensorCores get work via the
      "parallel" grid axis.
    * tiny B: a single full-batch block (block == full dim, no 8-row rule).
    """
    if B > batch_tile:
        return batch_tile
    if B >= 64:
        tb = pl.cdiv(pl.cdiv(B, 2), 8) * 8
        if tb < B:
            return tb
    return B


def cdefunc_forward(z, params, input_channels, hidden_channels,
                    batch_tile=1024, use_bf16=False):
    """z: (B, hidden_channels) -> (B, hidden_channels, input_channels)."""
    w_in, b_in, w_hid, b_hid, w_out, b_out = params
    B = z.shape[0]
    H = hidden_channels
    out_feat = input_channels * hidden_channels

    batch_tile = max(8, (int(batch_tile) // 8) * 8)
    TB = _pick_batch_tile(B, batch_tile)
    n_tiles = pl.cdiv(B, TB)          # ragged last tile handled by Pallas

    has_hidden = w_hid.shape[0] > 0

    if use_bf16:
        # Pre-cast once in the wrapper: weights stay VMEM-resident in bf16
        # (half the one-time DMA / VMEM) and z's HBM stream is halved.
        z_k = z.astype(jnp.bfloat16)
        w_in_k = w_in.astype(jnp.bfloat16)
        w_hid_k = w_hid.astype(jnp.bfloat16)
        w_out_k = w_out.astype(jnp.bfloat16)
    else:
        z_k, w_in_k, w_hid_k, w_out_k = z, w_in, w_hid, w_out

    operands = [z_k, w_in_k, b_in]
    in_specs = [
        # activations: tiled along batch, pipelined with the grid
        pl.BlockSpec((TB, H), lambda i: (i, 0)),
        # weights / biases: constant block index -> VMEM-resident
        pl.BlockSpec(w_in_k.shape, lambda i: (0, 0)),
        pl.BlockSpec(b_in.shape, lambda i: (0, 0)),
    ]
    if has_hidden:
        operands += [w_hid_k, b_hid]
        in_specs += [
            pl.BlockSpec(w_hid_k.shape, lambda i: (0, 0, 0)),
            pl.BlockSpec(b_hid.shape, lambda i: (0, 0, 0)),
        ]
    operands += [w_out_k, b_out]
    in_specs += [
        pl.BlockSpec(w_out_k.shape, lambda i: (0, 0)),
        pl.BlockSpec(b_out.shape, lambda i: (0, 0)),
    ]

    kernel = _make_cdefunc_kernel(has_hidden, use_bf16)

    flat = pl.pallas_call(
        kernel,
        out_shape=jax.ShapeDtypeStruct((B, out_feat), jnp.float32),
        grid=(n_tiles,),
        in_specs=in_specs,
        out_specs=pl.BlockSpec((TB, out_feat), lambda i: (i, 0)),
        compiler_params=pltpu.CompilerParams(
            dimension_semantics=("parallel",),      # megacore on v7x
            vmem_limit_bytes=32 * 1024 * 1024,      # safe on 64 MiB v7x VMEM
        ),
    )(*operands)

    # view(B, hidden_channels, input_channels) -- metadata only
    return flat.reshape(B, hidden_channels, input_channels)


def init_params(key, input_channels, hidden_channels, hidden_hidden_channels,
                n_layers):
    """Deterministic init mimicking torch.nn.Linear (U[-1/sqrt(fan_in), +])."""
    ks = jax.random.split(key, 6)
    H, HH, IC = hidden_channels, hidden_hidden_channels, input_channels

    def unif(k, shape, fan_in):
        bound = 1.0 / jnp.sqrt(fan_in)
        return jax.random.uniform(k, shape, jnp.float32, -bound, bound)

    # weights stored transposed vs torch (F_in, F_out) so kernel does h @ W
    w_in = unif(ks[0], (H, HH), H)
    b_in = unif(ks[1], (1, HH), H)
    n_hidden = n_layers - 1
    w_hid = unif(ks[2], (n_hidden, HH, HH), HH)
    b_hid = unif(ks[3], (n_hidden, 1, HH), HH)
    w_out = unif(ks[4], (HH, IC * H), HH)
    b_out = unif(ks[5], (1, IC * H), HH)
    return w_in, b_in, w_hid, b_hid, w_out, b_out


def cdefunc_reference_f32(z, params):
    """Pure-f32 pure-JAX reference (original module semantics)."""
    w_in, b_in, w_hid, b_hid, w_out, b_out = params
    h = jnp.maximum(z @ w_in + b_in, 0.0)
    for i in range(w_hid.shape[0]):
        h = jnp.maximum(h @ w_hid[i] + b_hid[i], 0.0)
    return jnp.tanh(h @ w_out + b_out)


def cdefunc_reference_bf16(z, params):
    """Pure-JAX reference with bf16 operands / f32 accumulate."""
    w_in, b_in, w_hid, b_hid, w_out, b_out = params
    bf = jnp.bfloat16
    h = jnp.dot(z.astype(bf), w_in.astype(bf),
                preferred_element_type=jnp.float32)
    h = jnp.maximum(h + b_in, 0.0)
    for i in range(w_hid.shape[0]):
        h = jnp.dot(h.astype(bf), w_hid[i].astype(bf),
                    preferred_element_type=jnp.float32)
        h = jnp.maximum(h + b_hid[i], 0.0)
    out = jnp.dot(h.astype(bf), w_out.astype(bf),
                  preferred_element_type=jnp.float32)
    return jnp.tanh(out + b_out)


if __name__ == "__main__":
    # Module hyperparameters (small, consistent with CDEFunc.__init__)
    input_channels = 4
    hidden_channels = 32
    hidden_hidden_channels = 64
    n_layers = 3

    key = jax.random.PRNGKey(0)
    kz1, kz2, kp, kp1 = jax.random.split(key, 4)
    params = init_params(kp, input_channels, hidden_channels,
                         hidden_hidden_channels, n_layers)

    ok = True

    # Default (exact f32) path:
    #   B=8    -> single full-batch block
    #   B=300  -> split into 2 tiles of 152 (v7x megacore), ragged last tile
    #   B=300, batch_tile=128 -> 3 tiles, exercises the large-batch path
    cases = [(kz1, 8, {}), (kz2, 300, {}), (kz2, 300, {"batch_tile": 128})]
    for kz, B, kw in cases:
        z = jax.random.normal(kz, (B, hidden_channels), dtype=jnp.float32)
        out = cdefunc_forward(z, params, input_channels, hidden_channels, **kw)
        out = jax.block_until_ready(out)
        assert out.shape == (B, hidden_channels, input_channels)
        ref = cdefunc_reference_f32(z, params).reshape(
            B, hidden_channels, input_channels)
        # tolerance absorbs possible MXU-vs-XLA default matmul precision delta
        ok &= bool(jnp.allclose(out, ref, atol=2e-2, rtol=2e-2))

    # Opt-in bf16 path (halved input stream / weight VMEM)
    B = 300
    z = jax.random.normal(kz2, (B, hidden_channels), dtype=jnp.float32)
    out_bf = cdefunc_forward(z, params, input_channels, hidden_channels,
                             use_bf16=True)
    out_bf = jax.block_until_ready(out_bf)
    ref_bf = cdefunc_reference_bf16(z, params).reshape(
        B, hidden_channels, input_channels)
    ref_f32 = cdefunc_reference_f32(z, params).reshape(
        B, hidden_channels, input_channels)
    ok &= bool(jnp.allclose(out_bf, ref_bf, atol=2e-3, rtol=2e-3))
    ok &= bool(jnp.allclose(out_bf, ref_f32, atol=5e-2, rtol=5e-2))

    # n_layers == 1 (no hidden linears): zero-sized w_hid never reaches Mosaic
    params1 = init_params(kp1, input_channels, hidden_channels,
                          hidden_hidden_channels, 1)
    z1 = jax.random.normal(kz1, (16, hidden_channels), dtype=jnp.float32)
    out1 = cdefunc_forward(z1, params1, input_channels, hidden_channels)
    out1 = jax.block_until_ready(out1)
    ref1 = cdefunc_reference_f32(z1, params1).reshape(
        16, hidden_channels, input_channels)
    ok &= bool(jnp.allclose(out1, ref1, atol=2e-2, rtol=2e-2))

    assert ok
    print("KERNEL_OK")
</pallas_src>

<mosaic_0001>
module attributes {stable_mosaic.version = 11 : i64} {
  func.func @kernel(%arg0: i32, %arg1: memref<8x32xf32, #tpu.memory_space<vmem>>, %arg2: memref<32x64xf32, #tpu.memory_space<vmem>>, %arg3: memref<1x64xf32, #tpu.memory_space<vmem>>, %arg4: memref<2x64x64xf32, #tpu.memory_space<vmem>>, %arg5: memref<2x1x64xf32, #tpu.memory_space<vmem>>, %arg6: memref<64x128xf32, #tpu.memory_space<vmem>>, %arg7: memref<1x128xf32, #tpu.memory_space<vmem>>, %arg8: memref<8x128xf32, #tpu.memory_space<vmem>>) attributes {dimension_semantics = [#tpu.dimension_semantics<parallel>], iteration_bounds = array<i64: 1>, scalar_prefetch = 0 : i64, scratch_operands = 0 : i64, tpu.core_type = #tpu.core_type<tc>, window_params = [{transform_indices = @transform_0, window_bounds = array<i64: 8, 32>}, {pipeline_mode = #tpu.pipeline_mode<synchronous>, transform_indices = @transform_1, window_bounds = array<i64: 32, 64>}, {pipeline_mode = #tpu.pipeline_mode<synchronous>, transform_indices = @transform_2, window_bounds = array<i64: 1, 64>}, {pipeline_mode = #tpu.pipeline_mode<synchronous>, transform_indices = @transform_3, window_bounds = array<i64: 2, 64, 64>}, {pipeline_mode = #tpu.pipeline_mode<synchronous>, transform_indices = @transform_4, window_bounds = array<i64: 2, 1, 64>}, {pipeline_mode = #tpu.pipeline_mode<synchronous>, transform_indices = @transform_5, window_bounds = array<i64: 64, 128>}, {pipeline_mode = #tpu.pipeline_mode<synchronous>, transform_indices = @transform_6, window_bounds = array<i64: 1, 128>}, {transform_indices = @transform_7, window_bounds = array<i64: 8, 128>}]} {
    %c0 = arith.constant 0 : index
    %c0_0 = arith.constant 0 : index
    %0 = vector.load %arg1[%c0, %c0_0] : memref<8x32xf32, #tpu.memory_space<vmem>>, vector<8x32xf32>
    %c0_1 = arith.constant 0 : index
    %c0_2 = arith.constant 0 : index
    %1 = vector.load %arg2[%c0_1, %c0_2] : memref<32x64xf32, #tpu.memory_space<vmem>>, vector<32x64xf32>
    %cst = arith.constant dense<0.000000e+00> : vector<8x64xf32>
    %2 = tpu.matmul %0, %1, %cst {dimension_numbers = #tpu.dot_dimension_numbers<[1], [0], [0], [1], [0, 0, 1, 1], [], []>} : vector<8x32xf32>, vector<32x64xf32>, vector<8x64xf32> -> vector<8x64xf32>
    %c0_3 = arith.constant 0 : index
    %c0_4 = arith.constant 0 : index
    %3 = vector.load %arg3[%c0_3, %c0_4] : memref<1x64xf32, #tpu.memory_space<vmem>>, vector<1x64xf32>
    %4 = vector.broadcast %3 : vector<1x64xf32> to vector<8x64xf32>
    %5 = arith.addf %2, %4 : vector<8x64xf32>
    %cst_5 = arith.constant 0.000000e+00 : f32
    %6 = vector.broadcast %cst_5 : f32 to vector<8x64xf32>
    %7 = arith.maximumf %5, %6 : vector<8x64xf32>
    %c0_6 = arith.constant 0 : index
    %c0_7 = arith.constant 0 : index
    %c0_8 = arith.constant 0 : index
    %8 = vector.load %arg4[%c0_6, %c0_7, %c0_8] : memref<2x64x64xf32, #tpu.memory_space<vmem>>, vector<1x64x64xf32>
    %9 = vector.shape_cast %8 : vector<1x64x64xf32> to vector<64x64xf32>
    %cst_9 = arith.constant dense<0.000000e+00> : vector<8x64xf32>
    %10 = tpu.matmul %7, %9, %cst_9 {dimension_numbers = #tpu.dot_dimension_numbers<[1], [0], [0], [1], [0, 0, 1, 1], [], []>} : vector<8x64xf32>, vector<64x64xf32>, vector<8x64xf32> -> vector<8x64xf32>
    %c0_10 = arith.constant 0 : index
    %c0_11 = arith.constant 0 : index
    %c0_12 = arith.constant 0 : index
    %11 = vector.load %arg5[%c0_10, %c0_11, %c0_12] : memref<2x1x64xf32, #tpu.memory_space<vmem>>, vector<1x1x64xf32>
    %12 = vector.shape_cast %11 : vector<1x1x64xf32> to vector<1x64xf32>
    %13 = vector.broadcast %12 : vector<1x64xf32> to vector<8x64xf32>
    %14 = arith.addf %10, %13 : vector<8x64xf32>
    %cst_13 = arith.constant 0.000000e+00 : f32
    %15 = vector.broadcast %cst_13 : f32 to vector<8x64xf32>
    %16 = arith.maximumf %14, %15 : vector<8x64xf32>
    %c1 = arith.constant 1 : index
    %c0_14 = arith.constant 0 : index
    %c0_15 = arith.constant 0 : index
    %17 = vector.load %arg4[%c1, %c0_14, %c0_15] : memref<2x64x64xf32, #tpu.memory_space<vmem>>, vector<1x64x64xf32>
    %18 = vector.shape_cast %17 : vector<1x64x64xf32> to vector<64x64xf32>
    %cst_16 = arith.constant dense<0.000000e+00> : vector<8x64xf32>
    %19 = tpu.matmul %16, %18, %cst_16 {dimension_numbers = #tpu.dot_dimension_numbers<[1], [0], [0], [1], [0, 0, 1, 1], [], []>} : vector<8x64xf32>, vector<64x64xf32>, vector<8x64xf32> -> vector<8x64xf32>
    %c1_17 = arith.constant 1 : index
    %c0_18 = arith.constant 0 : index
    %c0_19 = arith.constant 0 : index
    %20 = vector.load %arg5[%c1_17, %c0_18, %c0_19] : memref<2x1x64xf32, #tpu.memory_space<vmem>>, vector<1x1x64xf32>
    %21 = vector.shape_cast %20 : vector<1x1x64xf32> to vector<1x64xf32>
    %22 = vector.broadcast %21 : vector<1x64xf32> to vector<8x64xf32>
    %23 = arith.addf %19, %22 : vector<8x64xf32>
    %cst_20 = arith.constant 0.000000e+00 : f32
    %24 = vector.broadcast %cst_20 : f32 to vector<8x64xf32>
    %25 = arith.maximumf %23, %24 : vector<8x64xf32>
    %c0_21 = arith.constant 0 : index
    %c0_22 = arith.constant 0 : index
    %26 = vector.load %arg6[%c0_21, %c0_22] : memref<64x128xf32, #tpu.memory_space<vmem>>, vector<64x128xf32>
    %cst_23 = arith.constant dense<0.000000e+00> : vector<8x128xf32>
    %27 = tpu.matmul %25, %26, %cst_23 {dimension_numbers = #tpu.dot_dimension_numbers<[1], [0], [0], [1], [0, 0, 1, 1], [], []>} : vector<8x64xf32>, vector<64x128xf32>, vector<8x128xf32> -> vector<8x128xf32>
    %c0_24 = arith.constant 0 : index
    %c0_25 = arith.constant 0 : index
    %28 = vector.load %arg7[%c0_24, %c0_25] : memref<1x128xf32, #tpu.memory_space<vmem>>, vector<1x128xf32>
    %29 = vector.broadcast %28 : vector<1x128xf32> to vector<8x128xf32>
    %30 = arith.addf %27, %29 : vector<8x128xf32>
    %31 = math.tanh %30 : vector<8x128xf32>
    %c0_26 = arith.constant 0 : index
    %c0_27 = arith.constant 0 : index
    %32 = vector.load %arg8[%c0_26, %c0_27] : memref<8x128xf32, #tpu.memory_space<vmem>>, vector<8x128xf32>
    tpu.vector_store %arg8[%c0_26, %c0_27], %31 {strides = array<i32>} : memref<8x128xf32, #tpu.memory_space<vmem>>, vector<8x128xf32>,
    return
  }
  func.func @transform_0(%arg0: i32) -> (i32, i32) {
    %c0_i32 = arith.constant 0 : i32
    %c0_i32_0 = arith.constant 0 : i32
    return %arg0, %c0_i32 : i32, i32
  }
  func.func @transform_1(%arg0: i32) -> (i32, i32) {
    %c0_i32 = arith.constant 0 : i32
    %c0_i32_0 = arith.constant 0 : i32
    %c0_i32_1 = arith.constant 0 : i32
    return %c0_i32, %c0_i32_0 : i32, i32
  }
  func.func @transform_2(%arg0: i32) -> (i32, i32) {
    %c0_i32 = arith.constant 0 : i32
    %c0_i32_0 = arith.constant 0 : i32
    %c0_i32_1 = arith.constant 0 : i32
    return %c0_i32, %c0_i32_0 : i32, i32
  }
  func.func @transform_3(%arg0: i32) -> (i32, i32, i32) {
    %c0_i32 = arith.constant 0 : i32
    %c0_i32_0 = arith.constant 0 : i32
    %c0_i32_1 = arith.constant 0 : i32
    %c0_i32_2 = arith.constant 0 : i32
    return %c0_i32, %c0_i32_0, %c0_i32_1 : i32, i32, i32
  }
  func.func @transform_4(%arg0: i32) -> (i32, i32, i32) {
    %c0_i32 = arith.constant 0 : i32
    %c0_i32_0 = arith.constant 0 : i32
    %c0_i32_1 = arith.constant 0 : i32
    %c0_i32_2 = arith.constant 0 : i32
    return %c0_i32, %c0_i32_0, %c0_i32_1 : i32, i32, i32
  }
  func.func @transform_5(%arg0: i32) -> (i32, i32) {
    %c0_i32 = arith.constant 0 : i32
    %c0_i32_0 = arith.constant 0 : i32
    %c0_i32_1 = arith.constant 0 : i32
    return %c0_i32, %c0_i32_0 : i32, i32
  }
  func.func @transform_6(%arg0: i32) -> (i32, i32) {
    %c0_i32 = arith.constant 0 : i32
    %c0_i32_0 = arith.constant 0 : i32
    %c0_i32_1 = arith.constant 0 : i32
    return %c0_i32, %c0_i32_0 : i32, i32
  }
  func.func @transform_7(%arg0: i32) -> (i32, i32) {
    %c0_i32 = arith.constant 0 : i32
    %c0_i32_0 = arith.constant 0 : i32
    return %arg0, %c0_i32 : i32, i32
  }
}

</mosaic_0001>

<llo_original>
// kernel: tpu_custom_call.1
$region0: #{tpu_custom_call.1}
  #allocation0 [shape = 'u32[]', space=smem, size = 0x4, offset = 0x4, fixed_abs, tag = 'smem constant byte address 0x4 - core index']
  #allocation1 [shape = 'u32[144,128]{1,0:T(1,128)}', space=vmem, size = 0x12000, scoped, tag = 'internal scratch']
  %s0 = inlined_call_operand.hbm [shape: f32[8,32], index: 0, kind: input, shape index: {}]
  %s1 = inlined_call_operand.hbm [shape: f32[32,64], index: 1, kind: input, shape index: {}]
  %s2 = inlined_call_operand.vmem [shape: f32[1,64], index: 2, kind: input, shape index: {}]
  %s3 = inlined_call_operand.hbm [shape: f32[2,64,64], index: 3, kind: input, shape index: {}]
  %s4 = inlined_call_operand.vmem [shape: f32[2,1,64], index: 4, kind: input, shape index: {}]
  %s5 = inlined_call_operand.hbm [shape: f32[64,128], index: 5, kind: input, shape index: {}]
  %s6 = inlined_call_operand.vmem [shape: f32[1,128], index: 6, kind: input, shape index: {}]
  %s7 = inlined_call_operand.hbm [shape: f32[8,128], index: 7, kind: output, shape index: {}]
  %s8 = sld [smem:[#allocation0]]
  $region54: #{tpu_custom_call.1} parent=0
    _
  %s10 = ssub.s32 1, %s8
  %s11 = scalar_select 0, %s10, %s8
  $region1: #{tpu_custom_call.1} parent=0
    #allocation2 [shape = 'u8[4096]{0}', space=vmem, size = 0x1000, scoped, tag = 'input window, operand 0, single buffered']
    #allocation3 [shape = 's32[1]{0}', space=sflag, size = 0x4, scoped, tag = 'scoped memory for tpu_custom_call.1']
    #allocation4 [shape = 's32[1]{0}', space=sflag, size = 0x4, scoped, tag = 'scoped memory for tpu_custom_call.1']
    #allocation5 [shape = 'u8[16384]{0}', space=vmem, size = 0x4000, scoped, tag = 'input window, operand 1, single buffered']
    #allocation6 [shape = 's32[1]{0}', space=sflag, size = 0x4, scoped, tag = 'scoped memory for tpu_custom_call.1']
    #allocation7 [shape = 'u8[65536]{0}', space=vmem, size = 0x10000, scoped, tag = 'input window, operand 3, single buffered']
    #allocation8 [shape = 'u8[32768]{0}', space=vmem, size = 0x8000, scoped, tag = 'input window, operand 5, single buffered']
    #allocation9 [shape = 's32[1]{0}', space=sflag, size = 0x4, scoped, tag = 'scoped memory for tpu_custom_call.1']
    #allocation10 [shape = 'u8[4096]{0}', space=vmem, size = 0x1000, scoped, tag = 'output window, operand 0, single buffered']
    %12 = vsyncpa [#allocation3], 0
    %13 = vsyncpa [#allocation6], 0
    %14 = vsyncpa [#allocation9], 0
    %15 = vsyncpa [#allocation4], 0
    // Predicated region
    $region2: #{tpu_custom_call.1} parent=1 // pred_check
      _
    $region3: #{tpu_custom_call.1} parent=1 // pred_check_branch
      %17 = sbr.rel (0) target = $region5
    $region4: #{tpu_custom_call.1} parent=1 // pred_region
      %s19 = ssub.s32 128, 128
      %20 = vsyncadd [#allocation3], %s19
      %s22 = sshll.u32 [#allocation2], 4
      %s23 = int_to_ptr.vmem [resolvable:$true] %s22
      %25 = dma.hbm_to_vmem [thread:$0]  %s0, 128, %s23, [#allocation3]
    $region5: #{tpu_custom_call.1} parent=1 // pred_fallthru
      _
    // Predicated region
    $region6: #{tpu_custom_call.1} parent=1 // pred_check
      _
    $region7: #{tpu_custom_call.1} parent=1 // pred_check_branch
      %27 = sbr.rel (0) target = $region9
    $region8: #{tpu_custom_call.1} parent=1 // pred_region
      %s29 = ssub.s32 512, 512
      %30 = vsyncadd [#allocation6], %s29
      %s31 = sshll.u32 [#allocation5], 4
      %s32 = int_to_ptr.vmem [resolvable:$true] %s31
      %37 = dma.hbm_to_vmem [thread:$0]  %s1, 512, %s32, [#allocation6], 128, 128, 8
    $region9: #{tpu_custom_call.1} parent=1 // pred_fallthru
      _
    // Predicated region
    $region10: #{tpu_custom_call.1} parent=1 // pred_check
      _
    $region11: #{tpu_custom_call.1} parent=1 // pred_check_branch
      %39 = sbr.rel (0) target = $region13
    $region12: #{tpu_custom_call.1} parent=1 // pred_region
      _
    $region13: #{tpu_custom_call.1} parent=1 // pred_fallthru
      _
    // Predicated region
    $region14: #{tpu_custom_call.1} parent=1 // pred_check
      _
    $region15: #{tpu_custom_call.1} parent=1 // pred_check_branch
      %41 = sbr.rel (0) target = $region17
    $region16: #{tpu_custom_call.1} parent=1 // pred_region
      %s43 = ssub.s32 2048, 2048
      %44 = vsyncadd [#allocation6], %s43
      %s45 = sshll.u32 [#allocation7], 4
      %s46 = int_to_ptr.vmem [resolvable:$true] %s45
      %51 = dma.hbm_to_vmem [thread:$0]  %s3, 2048, %s46, [#allocation6], 128, 128, 8
    $region17: #{tpu_custom_call.1} parent=1 // pred_fallthru
      _
    // Predicated region
    $region18: #{tpu_custom_call.1} parent=1 // pred_check
      _
    $region19: #{tpu_custom_call.1} parent=1 // pred_check_branch
      %53 = sbr.rel (0) target = $region21
    $region20: #{tpu_custom_call.1} parent=1 // pred_region
      _
    $region21: #{tpu_custom_call.1} parent=1 // pred_fallthru
      _
    // Predicated region
    $region22: #{tpu_custom_call.1} parent=1 // pred_check
      _
    $region23: #{tpu_custom_call.1} parent=1 // pred_check_branch
      %55 = sbr.rel (0) target = $region25
    $region24: #{tpu_custom_call.1} parent=1 // pred_region
      %s57 = ssub.s32 1024, 1024
      %58 = vsyncadd [#allocation9], %s57
      %s59 = sshll.u32 [#allocation8], 4
      %s60 = int_to_ptr.vmem [resolvable:$true] %s59
      %65 = dma.hbm_to_vmem [thread:$0]  %s5, 1024, %s60, [#allocation9], 128, 128, 8
    $region25: #{tpu_custom_call.1} parent=1 // pred_fallthru
      _
    // Predicated region
    $region26: #{tpu_custom_call.1} parent=1 // pred_check
      _
    $region27: #{tpu_custom_call.1} parent=1 // pred_check_branch
      %67 = sbr.rel (0) target = $region29
    $region28: #{tpu_custom_call.1} parent=1 // pred_region
      _
    $region29: #{tpu_custom_call.1} parent=1 // pred_fallthru
      _
    // Predicated region
    $region30: #{tpu_custom_call.1} parent=1 // pred_check
      _
    $region31: #{tpu_custom_call.1} parent=1 // pred_check_branch
      %69 = sbr.rel (0) target = $region33
    $region32: #{tpu_custom_call.1} parent=1 // pred_region
      %70 = dma.done [#allocation3], 128
    $region33: #{tpu_custom_call.1} parent=1 // pred_fallthru
      _
    // Predicated region
    $region34: #{tpu_custom_call.1} parent=1 // pred_check
      _
    $region35: #{tpu_custom_call.1} parent=1 // pred_check_branch
      %72 = sbr.rel (0) target = $region37
    $region36: #{tpu_custom_call.1} parent=1 // pred_region
      %73 = dma.done [#allocation6], 512
    $region37: #{tpu_custom_call.1} parent=1 // pred_fallthru
      _
    // Predicated region
    $region38: #{tpu_custom_call.1} parent=1 // pred_check
      _
    $region39: #{tpu_custom_call.1} parent=1 // pred_check_branch
      %75 = sbr.rel (0) target = $region41
    $region40: #{tpu_custom_call.1} parent=1 // pred_region
      %76 = dma.done [#allocation6], 2048
    $region41: #{tpu_custom_call.1} parent=1 // pred_fallthru
      _
    // Predicated region
    $region42: #{tpu_custom_call.1} parent=1 // pred_check
      _
    $region43: #{tpu_custom_call.1} parent=1 // pred_check_branch
      %78 = sbr.rel (0) target = $region45
    $region44: #{tpu_custom_call.1} parent=1 // pred_region
      %79 = dma.done [#allocation9], 1024
    $region45: #{tpu_custom_call.1} parent=1 // pred_fallthru
      _
    %v80 = vld [vmem:[#allocation2] sm:$0xff]
    %v81 = vld [vmem:[#allocation5] sm:$0xff]
    %v82 = vld [vmem:[#allocation5 + $0x8] sm:$0xff]
    %v83 = vld [vmem:[#allocation5 + $0x10] sm:$0xff]
    %v84 = vld [vmem:[#allocation5 + $0x18] sm:$0xff]
    %v85 = vld [vmem:[%s2] sm:$0x1]
    %v87 = vlaneseq
    %v88 = vshrl.u32 %v87, 7
    %v89 = vsub.s32 0, %v88
    %v90 = vrot.slane %v85, %v89
    %vm92 = vcmask 261120
    %v94 = vsel %vm92, %v80, 0
    %96 = vmatprep.subr.mxu0 0.0
    %97 = vmatpush1.msra.mxu0 %v81
    %98 = vmatprep.subr.mxu0 0.0
    %99 = vmatpush1.msra.mxu0 %v82
    %100 = vmatprep.subr.mxu0 0.0
    %101 = vmatpush1.msra.mxu0 %v83
    %102 = vmatprep.subr.mxu0 0.0
    %103 = vmatpush1.msra.mxu0 %v84
    %104 = vmatprep.subr.mxu0 0.0
    %105 = vmatpush1.msra.mxu0 0.0
    %106 = vmatprep.subr.mxu0 0.0
    %107 = vmatpush1.msra.mxu0 0.0
    %108 = vmatprep.subr.mxu0 0.0
    %109 = vmatpush1.msra.mxu0 0.0
    %110 = vmatprep.subr.mxu0 0.0
    %111 = vmatpush1.msra.mxu0 0.0
    %112 = vmatprep.subr.mxu0 0.0
    %113 = vmatpush1.msra.mxu0 0.0
    %114 = vmatprep.subr.mxu0 0.0
    %115 = vmatpush1.msra.mxu0 0.0
    %116 = vmatprep.subr.mxu0 0.0
    %117 = vmatpush1.msra.mxu0 0.0
    %118 = vmatprep.subr.mxu0 0.0
    %119 = vmatpush1.msra.mxu0 0.0
    %120 = vmatprep.subr.mxu0 0.0
    %121 = vmatpush1.msra.mxu0 0.0
    %122 = vmatprep.subr.mxu0 0.0
    %123 = vmatpush1.msra.mxu0 0.0
    %124 = vmatprep.subr.mxu0 0.0
    %125 = vmatpush1.msra.mxu0 0.0
    %126 = vmatprep.subr.mxu0 0.0
    %127 = vmatpush1.msra.mxu0 0.0
    %128 = vmatprep.subr.mxu0 0.0
    %129 = vmatpush1.msra.mxu0 0.0
    %130 = vmatprep.subr.mxu0 0.0
    %131 = vmatpush1.msra.mxu0 0.0
    %132 = vmatprep.subr.mxu0 0.0
    %133 = vmatpush1.msra.mxu0 0.0
    %134 = vmatprep.subr.mxu0 0.0
    %135 = vmatpush1.msra.mxu0 0.0
    %136 = vmatprep.subr.mxu0 0.0
    %137 = vmatpush1.msra.mxu0 0.0
    %138 = vmatprep.subr.mxu0 0.0
    %139 = vmatpush1.msra.mxu0 0.0
    %140 = vmatprep.subr.mxu0 0.0
    %141 = vmatpush1.msra.mxu0 0.0
    %142 = vmatprep.subr.mxu0 0.0
    %143 = vmatpush1.msra.mxu0 0.0
    %144 = vmatprep.subr.mxu0 0.0
    %145 = vmatpush1.msra.mxu0 0.0
    %146 = vmatprep.subr.mxu0 0.0
    %147 = vmatpush1.msra.mxu0 0.0
    %148 = vmatprep.subr.mxu0 0.0
    %149 = vmatpush1.msra.mxu0 0.0
    %150 = vmatprep.subr.mxu0 0.0
    %151 = vmatpush1.msra.mxu0 0.0
    %152 = vmatprep.subr.mxu0 0.0
    %153 = vmatpush1.msra.mxu0 0.0
    %154 = vmatprep.subr.mxu0 0.0
    %155 = vmatpush1.msra.mxu0 0.0
    %156 = vmatprep.subr.mxu0 0.0
    %157 = vmatpush1.msra.mxu0 0.0
    %158 = vmatprep.subr.mxu0 0.0
    %159 = vmatpush1.msra.mxu0 0.0
    %160 = vmatprep.mubr.f32.mxu0 0.0
    %161 = vmatmul.mubr.f32.gmra.mrb[0].mxu0 %v94
    %v162 = vpop.f32.mrb[0].mxu0
    %v163 = vadd.f32 %v90, %v162
    %v164 = vpop.f32.mrb[0].mxu0
    %165 = vdwg.mxu0
    %v166 = vmax.f32 %v163, 0.0
    %v167 = vld [vmem:[#allocation7] sm:$0xff]
    %v168 = vld [vmem:[#allocation7 + $0x8] sm:$0xff]
    %v169 = vld [vmem:[#allocation7 + $0x10] sm:$0xff]
    %v170 = vld [vmem:[#allocation7 + $0x18] sm:$0xff]
    %v171 = vld [vmem:[#allocation7 + $0x20] sm:$0xff]
    %v172 = vld [vmem:[#allocation7 + $0x28] sm:$0xff]
    %v173 = vld [vmem:[#allocation7 + $0x30] sm:$0xff]
    %v174 = vld [vmem:[#allocation7 + $0x38] sm:$0xff]
    %v175 = vld [vmem:[%s4] sm:$0x1]
    %v177 = vlaneseq
    %v178 = vshrl.u32 %v177, 7
    %v179 = vsub.s32 0, %v178
    %v180 = vrot.slane %v175, %v179
    %vm182 = vcmask 523264
    %v184 = vsel %vm182, %v166, 0
    %186 = vmatprep.subr.mxu0 0.0
    %187 = vmatpush1.msra.mxu0 %v167
    %188 = vmatprep.subr.mxu0 0.0
    %189 = vmatpush1.msra.mxu0 %v168
    %190 = vmatprep.subr.mxu0 0.0
    %191 = vmatpush1.msra.mxu0 %v169
    %192 = vmatprep.subr.mxu0 0.0
    %193 = vmatpush1.msra.mxu0 %v170
    %194 = vmatprep.subr.mxu0 0.0
    %195 = vmatpush1.msra.mxu0 %v171
    %196 = vmatprep.subr.mxu0 0.0
    %197 = vmatpush1.msra.mxu0 %v172
    %198 = vmatprep.subr.mxu0 0.0
    %199 = vmatpush1.msra.mxu0 %v173
    %200 = vmatprep.subr.mxu0 0.0
    %201 = vmatpush1.msra.mxu0 %v174
    %202 = vmatprep.subr.mxu0 0.0
    %203 = vmatpush1.msra.mxu0 0.0
    %204 = vmatprep.subr.mxu0 0.0
    %205 = vmatpush1.msra.mxu0 0.0
    %206 = vmatprep.subr.mxu0 0.0
    %207 = vmatpush1.msra.mxu0 0.0
    %208 = vmatprep.subr.mxu0 0.0
    %209 = vmatpush1.msra.mxu0 0.0
    %210 = vmatprep.subr.mxu0 0.0
    %211 = vmatpush1.msra.mxu0 0.0
    %212 = vmatprep.subr.mxu0 0.0
    %213 = vmatpush1.msra.mxu0 0.0
    %214 = vmatprep.subr.mxu0 0.0
    %215 = vmatpush1.msra.mxu0 0.0
    %216 = vmatprep.subr.mxu0 0.0
    %217 = vmatpush1.msra.mxu0 0.0
    %218 = vmatprep.subr.mxu0 0.0
    %219 = vmatpush1.msra.mxu0 0.0
    %220 = vmatprep.subr.mxu0 0.0
    %221 = vmatpush1.msra.mxu0 0.0
    %222 = vmatprep.subr.mxu0 0.0
    %223 = vmatpush1.msra.mxu0 0.0
    %224 = vmatprep.subr.mxu0 0.0
    %225 = vmatpush1.msra.mxu0 0.0
    %226 = vmatprep.subr.mxu0 0.0
    %227 = vmatpush1.msra.mxu0 0.0
    %228 = vmatprep.subr.mxu0 0.0
    %229 = vmatpush1.msra.mxu0 0.0
    %230 = vmatprep.subr.mxu0 0.0
    %231 = vmatpush1.msra.mxu0 0.0
    %232 = vmatprep.subr.mxu0 0.0
    %233 = vmatpush1.msra.mxu0 0.0
    %234 = vmatprep.subr.mxu0 0.0
    %235 = vmatpush1.msra.mxu0 0.0
    %236 = vmatprep.subr.mxu0 0.0
    %237 = vmatpush1.msra.mxu0 0.0
    %238 = vmatprep.subr.mxu0 0.0
    %239 = vmatpush1.msra.mxu0 0.0
    %240 = vmatprep.subr.mxu0 0.0
    %241 = vmatpush1.msra.mxu0 0.0
    %242 = vmatprep.subr.mxu0 0.0
    %243 = vmatpush1.msra.mxu0 0.0
    %244 = vmatprep.subr.mxu0 0.0
    %245 = vmatpush1.msra.mxu0 0.0
    %246 = vmatprep.subr.mxu0 0.0
    %247 = vmatpush1.msra.mxu0 0.0
    %248 = vmatprep.subr.mxu0 0.0
    %249 = vmatpush1.msra.mxu0 0.0
    %250 = vmatprep.mubr.f32.mxu0 0.0
    %251 = vmatmul.mubr.f32.gmra.mrb[0].mxu0 %v184
    %v252 = vpop.f32.mrb[0].mxu0
    %v253 = vadd.f32 %v180, %v252
    %v254 = vpop.f32.mrb[0].mxu0
    %255 = vdwg.mxu0
    %v256 = vmax.f32 %v253, 0.0
    %s257 = scalar_lea.vmem [#allocation7], 64
    %v258 = vld [vmem:[%s257] sm:$0xff]
    %v259 = vld [vmem:[%s257 + $0x8] sm:$0xff]
    %v260 = vld [vmem:[%s257 + $0x10] sm:$0xff]
    %v261 = vld [vmem:[%s257 + $0x18] sm:$0xff]
    %v262 = vld [vmem:[%s257 + $0x20] sm:$0xff]
    %v263 = vld [vmem:[%s257 + $0x28] sm:$0xff]
    %v264 = vld [vmem:[%s257 + $0x30] sm:$0xff]
    %v265 = vld [vmem:[%s257 + $0x38] sm:$0xff]
    %s266 = scalar_lea.vmem %s4, 1
    %v267 = vld [vmem:[%s266] sm:$0x1]
    %v269 = vlaneseq
    %v270 = vshrl.u32 %v269, 7
    %v271 = vsub.s32 0, %v270
    %v272 = vrot.slane %v267, %v271
    %v275 = vsel %vm182, %v256, 0
    %277 = vmatprep.subr.mxu0 0.0
    %278 = vmatpush1.msra.mxu0 %v258
    %279 = vmatprep.subr.mxu0 0.0
    %280 = vmatpush1.msra.mxu0 %v259
    %281 = vmatprep.subr.mxu0 0.0
    %282 = vmatpush1.msra.mxu0 %v260
    %283 = vmatprep.subr.mxu0 0.0
    %284 = vmatpush1.msra.mxu0 %v261
    %285 = vmatprep.subr.mxu0 0.0
    %286 = vmatpush1.msra.mxu0 %v262
    %287 = vmatprep.subr.mxu0 0.0
    %288 = vmatpush1.msra.mxu0 %v263
    %289 = vmatprep.subr.mxu0 0.0
    %290 = vmatpush1.msra.mxu0 %v264
    %291 = vmatprep.subr.mxu0 0.0
    %292 = vmatpush1.msra.mxu0 %v265
    %293 = vmatprep.subr.mxu0 0.0
    %294 = vmatpush1.msra.mxu0 0.0
    %295 = vmatprep.subr.mxu0 0.0
    %296 = vmatpush1.msra.mxu0 0.0
    %297 = vmatprep.subr.mxu0 0.0
    %298 = vmatpush1.msra.mxu0 0.0
    %299 = vmatprep.subr.mxu0 0.0
    %300 = vmatpush1.msra.mxu0 0.0
    %301 = vmatprep.subr.mxu0 0.0
    %302 = vmatpush1.msra.mxu0 0.0
    %303 = vmatprep.subr.mxu0 0.0
    %304 = vmatpush1.msra.mxu0 0.0
    %305 = vmatprep.subr.mxu0 0.0
    %306 = vmatpush1.msra.mxu0 0.0
    %307 = vmatprep.subr.mxu0 0.0
    %308 = vmatpush1.msra.mxu0 0.0
    %309 = vmatprep.subr.mxu0 0.0
    %310 = vmatpush1.msra.mxu0 0.0
    %311 = vmatprep.subr.mxu0 0.0
    %312 = vmatpush1.msra.mxu0 0.0
    %313 = vmatprep.subr.mxu0 0.0
    %314 = vmatpush1.msra.mxu0 0.0
    %315 = vmatprep.subr.mxu0 0.0
    %316 = vmatpush1.msra.mxu0 0.0
    %317 = vmatprep.subr.mxu0 0.0
    %318 = vmatpush1.msra.mxu0 0.0
    %319 = vmatprep.subr.mxu0 0.0
    %320 = vmatpush1.msra.mxu0 0.0
    %321 = vmatprep.subr.mxu0 0.0
    %322 = vmatpush1.msra.mxu0 0.0
    %323 = vmatprep.subr.mxu0 0.0
    %324 = vmatpush1.msra.mxu0 0.0
    %325 = vmatprep.subr.mxu0 0.0
    %326 = vmatpush1.msra.mxu0 0.0
    %327 = vmatprep.subr.mxu0 0.0
    %328 = vmatpush1.msra.mxu0 0.0
    %329 = vmatprep.subr.mxu0 0.0
    %330 = vmatpush1.msra.mxu0 0.0
    %331 = vmatprep.subr.mxu0 0.0
    %332 = vmatpush1.msra.mxu0 0.0
    %333 = vmatprep.subr.mxu0 0.0
    %334 = vmatpush1.msra.mxu0 0.0
    %335 = vmatprep.subr.mxu0 0.0
    %336 = vmatpush1.msra.mxu0 0.0
    %337 = vmatprep.subr.mxu0 0.0
    %338 = vmatpush1.msra.mxu0 0.0
    %339 = vmatprep.subr.mxu0 0.0
    %340 = vmatpush1.msra.mxu0 0.0
    %341 = vmatprep.mubr.f32.mxu0 0.0
    %342 = vmatmul.mubr.f32.gmra.mrb[0].mxu0 %v275
    %v343 = vpop.f32.mrb[0].mxu0
    %v344 = vadd.f32 %v272, %v343
    %v345 = vpop.f32.mrb[0].mxu0
    %346 = vdwg.mxu0
    %v347 = vmax.f32 %v344, 0.0
    %v348 = vld [vmem:[#allocation8] sm:$0xff]
    %v349 = vld [vmem:[#allocation8 + $0x8] sm:$0xff]
    %v350 = vld [vmem:[#allocation8 + $0x10] sm:$0xff]
    %v351 = vld [vmem:[#allocation8 + $0x18] sm:$0xff]
    %v352 = vld [vmem:[#allocation8 + $0x20] sm:$0xff]
    %v353 = vld [vmem:[#allocation8 + $0x28] sm:$0xff]
    %v354 = vld [vmem:[#allocation8 + $0x30] sm:$0xff]
    %v355 = vld [vmem:[#allocation8 + $0x38] sm:$0xff]
    %v356 = vld [vmem:[%s6] sm:$0x1]
    %v358 = vlaneseq
    %v359 = vshrl.u32 %v358, 7
    %v360 = vsub.s32 0, %v359
    %v361 = vrot.slane %v356, %v360
    %v364 = vsel %vm182, %v347, 0
    %366 = vmatprep.subr.mxu0 0.0
    %367 = vmatpush1.msra.mxu0 %v348
    %368 = vmatprep.subr.mxu0 0.0
    %369 = vmatpush1.msra.mxu0 %v349
    %370 = vmatprep.subr.mxu0 0.0
    %371 = vmatpush1.msra.mxu0 %v350
    %372 = vmatprep.subr.mxu0 0.0
    %373 = vmatpush1.msra.mxu0 %v351
    %374 = vmatprep.subr.mxu0 0.0
    %375 = vmatpush1.msra.mxu0 %v352
    %376 = vmatprep.subr.mxu0 0.0
    %377 = vmatpush1.msra.mxu0 %v353
    %378 = vmatprep.subr.mxu0 0.0
    %379 = vmatpush1.msra.mxu0 %v354
    %380 = vmatprep.subr.mxu0 0.0
    %381 = vmatpush1.msra.mxu0 %v355
    %382 = vmatprep.subr.mxu0 0.0
    %383 = vmatpush1.msra.mxu0 0.0
    %384 = vmatprep.subr.mxu0 0.0
    %385 = vmatpush1.msra.mxu0 0.0
    %386 = vmatprep.subr.mxu0 0.0
    %387 = vmatpush1.msra.mxu0 0.0
    %388 = vmatprep.subr.mxu0 0.0
    %389 = vmatpush1.msra.mxu0 0.0
    %390 = vmatprep.subr.mxu0 0.0
    %391 = vmatpush1.msra.mxu0 0.0
    %392 = vmatprep.subr.mxu0 0.0
    %393 = vmatpush1.msra.mxu0 0.0
    %394 = vmatprep.subr.mxu0 0.0
    %395 = vmatpush1.msra.mxu0 0.0
    %396 = vmatprep.subr.mxu0 0.0
    %397 = vmatpush1.msra.mxu0 0.0
    %398 = vmatprep.subr.mxu0 0.0
    %399 = vmatpush1.msra.mxu0 0.0
    %400 = vmatprep.subr.mxu0 0.0
    %401 = vmatpush1.msra.mxu0 0.0
    %402 = vmatprep.subr.mxu0 0.0
    %403 = vmatpush1.msra.mxu0 0.0
    %404 = vmatprep.subr.mxu0 0.0
    %405 = vmatpush1.msra.mxu0 0.0
    %406 = vmatprep.subr.mxu0 0.0
    %407 = vmatpush1.msra.mxu0 0.0
    %408 = vmatprep.subr.mxu0 0.0
    %409 = vmatpush1.msra.mxu0 0.0
    %410 = vmatprep.subr.mxu0 0.0
    %411 = vmatpush1.msra.mxu0 0.0
    %412 = vmatprep.subr.mxu0 0.0
    %413 = vmatpush1.msra.mxu0 0.0
    %414 = vmatprep.subr.mxu0 0.0
    %415 = vmatpush1.msra.mxu0 0.0
    %416 = vmatprep.subr.mxu0 0.0
    %417 = vmatpush1.msra.mxu0 0.0
    %418 = vmatprep.subr.mxu0 0.0
    %419 = vmatpush1.msra.mxu0 0.0
    %420 = vmatprep.subr.mxu0 0.0
    %421 = vmatpush1.msra.mxu0 0.0
    %422 = vmatprep.subr.mxu0 0.0
    %423 = vmatpush1.msra.mxu0 0.0
    %424 = vmatprep.subr.mxu0 0.0
    %425 = vmatpush1.msra.mxu0 0.0
    %426 = vmatprep.subr.mxu0 0.0
    %427 = vmatpush1.msra.mxu0 0.0
    %428 = vmatprep.subr.mxu0 0.0
    %429 = vmatpush1.msra.mxu0 0.0
    %430 = vmatprep.mubr.f32.mxu0 0.0
    %431 = vmatmul.mubr.f32.gmra.mrb[0].mxu0 %v364
    %v432 = vpop.f32.mrb[0].mxu0
    %v433 = vadd.f32 %v361, %v432
    %v434 = vpop.f32.mrb[0].mxu0
    %435 = vdwg.mxu0
    %v436 = vtanh.pop %v433
    %437 = vst [vmem:[#allocation10] sm:$0xff] %v436
    // Predicated region
    $region46: #{tpu_custom_call.1} parent=1 // pred_check
      _
    $region47: #{tpu_custom_call.1} parent=1 // pred_check_branch
      %439 = sbr.rel (0) target = $region49
    $region48: #{tpu_custom_call.1} parent=1 // pred_region
      %s441 = ssub.s32 128, 128
      %442 = vsyncadd [#allocation4], %s441
      %s444 = sshll.u32 [#allocation10], 4
      %s445 = int_to_ptr.vmem [resolvable:$true] %s444
      %447 = dma.vmem_to_hbm [thread:$0]  %s445, 128, %s7, [#allocation4]
    $region49: #{tpu_custom_call.1} parent=1 // pred_fallthru
      _
    // Predicated region
    $region50: #{tpu_custom_call.1} parent=1 // pred_check
      _
    $region51: #{tpu_custom_call.1} parent=1 // pred_check_branch
      %449 = sbr.rel (0) target = $region53
    $region52: #{tpu_custom_call.1} parent=1 // pred_region
      %450 = dma.done [#allocation4], 128
    $region53: #{tpu_custom_call.1} parent=1 // pred_fallthru
      _
    %451 = vsyncpa [#allocation3], 1
    %452 = vsyncpa [#allocation6], 1
    %453 = vsyncpa [#allocation9], 1
    %454 = vsyncpa [#allocation4], 1

</llo_original>
